<compile_context>
chip_gen: v6e
topology: v6e:2x2x1
jax: 0.10.0
libtpu: 0.0.40
codegen_flags: <defaults>
</compile_context>

<pallas_src>
import math
import functools

import jax
import jax.numpy as jnp
from jax.experimental import pallas as pl
from jax.experimental.pallas import tpu as pltpu


# ----------------------------------------------------------------------------- kernels


def _pos_emb_resident_kernel(tok_smem, emb_ref, pos_ref, out_ref, *, scale):
    """Embedding table resident in VMEM; gather = per-row dynamic slices.

    tok_smem: (B, S) int32 in SMEM (scalar-prefetched token ids)
    emb_ref : (V, E) full embedding table, VMEM-resident (constant index_map)
    pos_ref : (TS, E) positional rows for this sequence tile
    out_ref : (B, TS, E)
    """
    si = pl.program_id(0)
    nb, ts, _ = out_ref.shape
    v = emb_ref.shape[0]

    for b in range(nb):                       # static unroll over batch rows (B small)

        @pl.loop(0, ts)
        def _(s, b=b):
            tok = jnp.clip(tok_smem[b, si * ts + s], 0, v - 1)
            row = emb_ref[pl.ds(tok, 1), :].astype(jnp.float32)          # (1, E) gather
            val = row * scale + pos_ref[pl.ds(s, 1), :].astype(jnp.float32)
            out_ref[pl.ds(b, 1), pl.ds(s, 1), :] = val[None].astype(out_ref.dtype)


def _pos_emb_hbm_gather_kernel(tok_smem, table_hbm, pos_ref, out_ref,
                               row_buf, sem, *, scale):
    """Large-vocab path: table stays in HBM, manual double-buffered row-DMA gather.

    tok_smem : (B, S) int32 in SMEM
    table_hbm: (V, E) embedding table in HBM (memory_space=pl.ANY)
    pos_ref  : (TS, E)
    out_ref  : (B, TS, E)
    row_buf  : VMEM (2, 1, E) double buffer; sem: DMA semaphores (2,)
    """
    si = pl.program_id(0)
    nb, ts, _ = out_ref.shape
    v = table_hbm.shape[0]
    n_rows = nb * ts

    def token(r):
        b = r // ts
        s = r % ts
        return jnp.clip(tok_smem[b, si * ts + s], 0, v - 1), b, s

    def start_fetch(r, slot):
        tok, _, _ = token(r)
        pltpu.make_async_copy(table_hbm.at[pl.ds(tok, 1), :],
                              row_buf.at[slot], sem.at[slot]).start()

    start_fetch(0, 0)

    @pl.loop(0, n_rows)
    def _(r):
        slot = r % 2
        pltpu.make_async_copy(table_hbm.at[pl.ds(0, 1), :],
                              row_buf.at[slot], sem.at[slot]).wait()

        @pl.when(r + 1 < n_rows)
        def _():
            start_fetch(r + 1, 1 - slot)

        _, b, s = token(r)
        row = row_buf[slot].astype(jnp.float32)                          # (1, E)
        val = row * scale + pos_ref[pl.ds(s, 1), :].astype(jnp.float32)
        out_ref[pl.ds(b, 1), pl.ds(s, 1), :] = val[None].astype(out_ref.dtype)


# ----------------------------------------------------------------------------- wrapper


def _vmem_budget_bytes():
    """Per-generation usable VMEM (physical capacity minus ~20% headroom)."""
    cap = 64 << 20                                   # conservative fallback (v7x per-core)
    try:
        cap = int(pltpu.get_tpu_info().vmem_capacity_bytes)
    except Exception:
        pass
    return int(cap * 0.8)                            # ~102 MiB on 128 MiB parts, ~51 MiB on v7x


def _pick_seq_tile(seq_len, batch, emb, itemsize, tile_budget):
    """Largest tile that divides seq_len, is a multiple of 8 (or the whole sequence),
    and keeps the double-buffered output + pos tiles under the byte budget."""
    e_pad = ((emb + 127) // 128) * 128               # VMEM buffers are lane-padded to 128
    per_row = 2 * batch * e_pad * itemsize + 2 * e_pad * itemsize
    cap = max(8, tile_budget // max(1, per_row))
    cap = min(seq_len, 2048, int(cap))
    for t in range(cap, 0, -1):
        if seq_len % t == 0 and (t % 8 == 0 or t == seq_len):
            return t
    # NOTE(synk): fallback ts == seq_len can exceed the budget for pathological S
    # (no multiple-of-8 divisor under cap); that fails loudly at compile, not silently.
    return seq_len


def positional_embedding_forward(tokens, emb_table, pos_table):
    """tokens: (B, S) int; emb_table: (V, E) float; pos_table: (max_len, E) float."""
    B, S = tokens.shape
    V, E = emb_table.shape
    assert pos_table.shape[0] >= S and pos_table.shape[1] == E
    scale = float(math.sqrt(E))
    itemsize = jnp.dtype(emb_table.dtype).itemsize

    vmem_budget = _vmem_budget_bytes()
    table_alloc = 2 * V * E * itemsize               # BlockSpec double-buffers even constant blocks
    resident = table_alloc <= vmem_budget - (16 << 20)

    fixed = table_alloc if resident else 4 * E * itemsize * 2           # table or row_buf
    tile_budget = max(1 << 20, vmem_budget - fixed - (4 << 20))
    ts = _pick_seq_tile(S, B, E, itemsize, tile_budget)
    n_tiles = S // ts

    tokens = tokens.astype(jnp.int32)
    pos = pos_table[:S].astype(emb_table.dtype)

    pos_spec = pl.BlockSpec((ts, E), lambda si, tok: (si, 0))
    out_spec = pl.BlockSpec((B, ts, E), lambda si, tok: (0, si, 0))

    if resident:
        kernel = functools.partial(_pos_emb_resident_kernel, scale=scale)
        emb_spec = pl.BlockSpec((V, E), lambda si, tok: (0, 0))         # fetched once, reused
        scratch = []
    else:
        kernel = functools.partial(_pos_emb_hbm_gather_kernel, scale=scale)
        emb_spec = pl.BlockSpec(memory_space=pl.ANY)                    # table stays in HBM
        scratch = [pltpu.VMEM((2, 1, E), emb_table.dtype),
                   pltpu.SemaphoreType.DMA((2,))]

    grid_spec = pltpu.PrefetchScalarGridSpec(
        num_scalar_prefetch=1,                       # token ids -> SMEM, visible to index_maps
        grid=(n_tiles,),
        in_specs=[emb_spec, pos_spec],
        out_specs=out_spec,
        scratch_shapes=scratch)

    return pl.pallas_call(
        kernel,
        out_shape=jax.ShapeDtypeStruct((B, S, E), emb_table.dtype),
        grid_spec=grid_spec,
        compiler_params=pltpu.CompilerParams(
            dimension_semantics=("parallel",),
            vmem_limit_bytes=int(vmem_budget)),
    )(tokens, emb_table, pos)


# ----------------------------------------------------------------------------- demo


def make_pos_table(max_len, emb_size):
    inv_freq = jnp.exp(-jnp.arange(0, emb_size, 2, dtype=jnp.float32)
                       * math.log(10000.0) / emb_size)
    pos = jnp.arange(max_len, dtype=jnp.float32).reshape(max_len, 1)
    pe = jnp.zeros((max_len, emb_size), dtype=jnp.float32)
    pe = pe.at[:, 0::2].set(jnp.sin(pos * inv_freq))
    pe = pe.at[:, 1::2].set(jnp.cos(pos * inv_freq))
    return pe


if __name__ == "__main__":
    # Module hyperparameters (small, consistent with the forward pass)
    vocab_size, emb_size, dropout_prob, max_len = 50, 32, 0.1, 64
    B, S = 2, 8

    key = jax.random.PRNGKey(0)
    k_emb, k_tok = jax.random.split(key)

    emb_table = jax.random.normal(k_emb, (vocab_size, emb_size), dtype=jnp.float32)
    pos_table = make_pos_table(max_len, emb_size)
    tokens = jax.random.randint(k_tok, (B, S), 0, vocab_size, dtype=jnp.int32)

    out = positional_embedding_forward(tokens, emb_table, pos_table)
    out = jax.block_until_ready(out)

    # Plain-JAX reference (dropout is identity in eval mode)
    ref = emb_table[tokens] * math.sqrt(emb_size) + pos_table[:S][None, :, :]
    assert out.shape == (B, S, emb_size)
    assert jnp.allclose(out, ref, atol=1e-5, rtol=1e-5), "mismatch vs reference"

    print("KERNEL_OK")
</pallas_src>

<mosaic_0001>
module attributes {stable_mosaic.version = 11 : i64} {
  func.func @_pos_emb_resident_kernel(%arg0: i32, %arg1: memref<2x8xi32, #tpu.memory_space<smem>>, %arg2: memref<50x32xf32, #tpu.memory_space<vmem>>, %arg3: memref<8x32xf32, #tpu.memory_space<vmem>>, %arg4: memref<2x8x32xf32, #tpu.memory_space<vmem>>) attributes {dimension_semantics = [#tpu.dimension_semantics<parallel>], iteration_bounds = array<i64: 1>, scalar_prefetch = 1 : i64, scratch_operands = 0 : i64, tpu.core_type = #tpu.core_type<tc>, window_params = [{pipeline_mode = #tpu.pipeline_mode<synchronous>, transform_indices = @transform_0, window_bounds = array<i64: 50, 32>}, {transform_indices = @transform_1, window_bounds = array<i64: 8, 32>}, {transform_indices = @transform_2, window_bounds = array<i64: 2, 8, 32>}]} {
    %c0_i32 = arith.constant 0 : i32
    %c8_i32 = arith.constant 8 : i32
    %0 = arith.addi %c0_i32, %c8_i32 : i32
    %c1_i32 = arith.constant 1 : i32
    scf.for %arg5 = %c0_i32 to %0 step %c1_i32  : i32 {
      %c1_i32_5 = arith.constant 1 : i32
      %2 = arith.muli %arg5, %c1_i32_5 : i32
      %c0_i32_6 = arith.constant 0 : i32
      %3 = arith.addi %c0_i32_6, %2 : i32
      %c8_i32_7 = arith.constant 8 : i32
      %4 = arith.muli %arg0, %c8_i32_7 : i32
      %5 = arith.addi %4, %3 : i32
      %c0 = arith.constant 0 : index
      %6 = arith.index_cast %5 : i32 to index
      %7 = memref.load %arg1[%c0, %6] : memref<2x8xi32, #tpu.memory_space<smem>>
      %c0_i32_8 = arith.constant 0 : i32
      %c49_i32 = arith.constant 49 : i32
      %8 = arith.maxsi %c0_i32_8, %7 : i32
      %9 = arith.minsi %c49_i32, %8 : i32
      %10 = arith.index_cast %9 : i32 to index
      %c0_9 = arith.constant 0 : index
      %11 = vector.load %arg2[%10, %c0_9] : memref<50x32xf32, #tpu.memory_space<vmem>>, vector<1x32xf32>
      %cst = arith.constant 5.65685415 : f32
      %12 = vector.broadcast %cst : f32 to vector<1x32xf32>
      %13 = arith.mulf %11, %12 : vector<1x32xf32>
      %14 = arith.index_cast %3 : i32 to index
      %c0_10 = arith.constant 0 : index
      %15 = vector.load %arg3[%14, %c0_10] : memref<8x32xf32, #tpu.memory_space<vmem>>, vector<1x32xf32>
      %16 = arith.addf %13, %15 : vector<1x32xf32>
      %17 = vector.shape_cast %16 : vector<1x32xf32> to vector<1x1x32xf32>
      %c0_11 = arith.constant 0 : index
      %18 = arith.index_cast %3 : i32 to index
      %c0_12 = arith.constant 0 : index
      %19 = vector.load %arg4[%c0_11, %18, %c0_12] : memref<2x8x32xf32, #tpu.memory_space<vmem>>, vector<1x1x32xf32>
      tpu.vector_store %arg4[%c0_11, %18, %c0_12], %17 {strides = array<i32>} : memref<2x8x32xf32, #tpu.memory_space<vmem>>, vector<1x1x32xf32>,
    }
    %c8_i32_0 = arith.constant 8 : i32
    %c0_i32_1 = arith.constant 0 : i32
    %c8_i32_2 = arith.constant 8 : i32
    %1 = arith.addi %c0_i32_1, %c8_i32_2 : i32
    %c1_i32_3 = arith.constant 1 : i32
    scf.for %arg5 = %c0_i32_1 to %1 step %c1_i32_3  : i32 {
      %c1_i32_5 = arith.constant 1 : i32
      %2 = arith.muli %arg5, %c1_i32_5 : i32
      %c0_i32_6 = arith.constant 0 : i32
      %3 = arith.addi %c0_i32_6, %2 : i32
      %c8_i32_7 = arith.constant 8 : i32
      %4 = arith.muli %arg0, %c8_i32_7 : i32
      %5 = arith.addi %4, %3 : i32
      %c1 = arith.constant 1 : index
      %6 = arith.index_cast %5 : i32 to index
      %7 = memref.load %arg1[%c1, %6] : memref<2x8xi32, #tpu.memory_space<smem>>
      %c0_i32_8 = arith.constant 0 : i32
      %c49_i32 = arith.constant 49 : i32
      %8 = arith.maxsi %c0_i32_8, %7 : i32
      %9 = arith.minsi %c49_i32, %8 : i32
      %10 = arith.index_cast %9 : i32 to index
      %c0 = arith.constant 0 : index
      %11 = vector.load %arg2[%10, %c0] : memref<50x32xf32, #tpu.memory_space<vmem>>, vector<1x32xf32>
      %cst = arith.constant 5.65685415 : f32
      %12 = vector.broadcast %cst : f32 to vector<1x32xf32>
      %13 = arith.mulf %11, %12 : vector<1x32xf32>
      %14 = arith.index_cast %3 : i32 to index
      %c0_9 = arith.constant 0 : index
      %15 = vector.load %arg3[%14, %c0_9] : memref<8x32xf32, #tpu.memory_space<vmem>>, vector<1x32xf32>
      %16 = arith.addf %13, %15 : vector<1x32xf32>
      %17 = vector.shape_cast %16 : vector<1x32xf32> to vector<1x1x32xf32>
      %c1_10 = arith.constant 1 : index
      %18 = arith.index_cast %3 : i32 to index
      %c0_11 = arith.constant 0 : index
      %19 = vector.load %arg4[%c1_10, %18, %c0_11] : memref<2x8x32xf32, #tpu.memory_space<vmem>>, vector<1x1x32xf32>
      tpu.vector_store %arg4[%c1_10, %18, %c0_11], %17 {strides = array<i32>} : memref<2x8x32xf32, #tpu.memory_space<vmem>>, vector<1x1x32xf32>,
    }
    %c8_i32_4 = arith.constant 8 : i32
    return
  }
  func.func @transform_0(%arg0: i32, %arg1: memref<2x8xi32, #tpu.memory_space<smem>>) -> (i32, i32) {
    %c0_i32 = arith.constant 0 : i32
    %c0_i32_0 = arith.constant 0 : i32
    %c0_i32_1 = arith.constant 0 : i32
    return %c0_i32, %c0_i32_0 : i32, i32
  }
  func.func @transform_1(%arg0: i32, %arg1: memref<2x8xi32, #tpu.memory_space<smem>>) -> (i32, i32) {
    %c0_i32 = arith.constant 0 : i32
    %c0_i32_0 = arith.constant 0 : i32
    return %arg0, %c0_i32 : i32, i32
  }
  func.func @transform_2(%arg0: i32, %arg1: memref<2x8xi32, #tpu.memory_space<smem>>) -> (i32, i32, i32) {
    %c0_i32 = arith.constant 0 : i32
    %c0_i32_0 = arith.constant 0 : i32
    %c0_i32_1 = arith.constant 0 : i32
    return %c0_i32, %arg0, %c0_i32_0 : i32, i32, i32
  }
}

</mosaic_0001>

<llo_original>
// kernel: tpu_custom_call.1
$region0: #{tpu_custom_call.1}
  #allocation0 [shape = 'u32[]', space=smem, size = 0x4, offset = 0x4, fixed_abs, tag = 'smem constant byte address 0x4 - core index']
  #allocation1 [shape = 'u32[144,128]{1,0:T(1,128)}', space=vmem, size = 0x12000, scoped, tag = 'internal scratch']
  #allocation2 [shape = 's32[1]{0}', space=sflag, size = 0x4, scoped, tag = 'scoped memory for tpu_custom_call.1']
  #allocation3 [shape = 'u8[1024]{0}', space=smem, size = 0x400, scoped, tag = 'prefetched SMEM operand 0']
  %s0 = inlined_call_operand.vmem [shape: s32[2,8], index: 0, kind: input, shape index: {}]
  %s1 = inlined_call_operand.vmem [shape: f32[50,32], index: 1, kind: input, shape index: {}]
  %s2 = inlined_call_operand.vmem [shape: f32[8,32], index: 2, kind: input, shape index: {}]
  %s3 = inlined_call_operand.hbm [shape: f32[2,8,32], index: 3, kind: output, shape index: {}]
  %s4 = sld [smem:[#allocation0]]
  $region32: #{tpu_custom_call.1} parent=0
    _
  %s6 = ssub.s32 1, %s4
  %s7 = scalar_select 0, %s6, %s4
  %s8 = sshll.u32 %s0, 4
  %s9 = int_to_ptr.vmem [resolvable:$true] %s8
  %11 = dma.vmem_to_smem %s9, 32, [#allocation3], [#allocation2]
  %12 = dma.done [#allocation2], 32
  %13 = sfence
  $region1: #{tpu_custom_call.1} parent=0
    #allocation4 [shape = 'u8[8192]{0}', space=vmem, size = 0x2000, scoped, tag = 'output window, operand 0, single buffered']
    #allocation5 [shape = 's32[1]{0}', space=sflag, size = 0x4, scoped, tag = 'scoped memory for tpu_custom_call.1']
    %14 = vsyncpa [#allocation5], 0
    // Predicated region
    $region2: #{tpu_custom_call.1} parent=1 // pred_check
      _
    $region3: #{tpu_custom_call.1} parent=1 // pred_check_branch
      %16 = sbr.rel (0) target = $region5
    $region4: #{tpu_custom_call.1} parent=1 // pred_region
      _
    $region5: #{tpu_custom_call.1} parent=1 // pred_fallthru
      _
    // Predicated region
    $region6: #{tpu_custom_call.1} parent=1 // pred_check
      _
    $region7: #{tpu_custom_call.1} parent=1 // pred_check_branch
      %18 = sbr.rel (0) target = $region9
    $region8: #{tpu_custom_call.1} parent=1 // pred_region
      _
    $region9: #{tpu_custom_call.1} parent=1 // pred_fallthru
      _
    loop: start=0, step=1, limit=8
    $region10: #{tpu_custom_call.1} parent=1 // loop_pre_header
      _
    $region11: #{tpu_custom_call.1} parent=1 // loop_header
      %s20 = sphi 0, %s24
      %p21 = scmp.ge.s32.totalorder %s20, 8
    $region12: #{tpu_custom_call.1} parent=1 // loop_header_branch
      %23 = sbr.rel (%p21) target = $region16
    $region13: #{tpu_custom_call.1} parent=1 // loop_body
      %s25 = smul.u32 0, 8
      %s26 = sadd.s32 %s25, %s20
      %s27 = sld [smem:[#allocation3 + %s26]]
      %p28 = scmp.gt.s32.totalorder %s27, 0
      %s29 = scalar_select %p28, %s27, 0
      %p30 = scmp.lt.s32.totalorder %s29, 49
      %s31 = scalar_select %p30, %s29, 49
      %s32 = scalar_lea.vmem %s1, %s31
      %v33 = vld [vmem:[%s32] sm:$0x1]
      %v34 = vmul.f32 %v33, 5.656854
      %s35 = scalar_lea.vmem %s2, %s20
      %v36 = vld [vmem:[%s35] sm:$0x1]
      %v37 = vadd.f32 %v34, %v36
      %s38 = scalar_lea.vmem [#allocation4], %s20
      %vm39 = vcmask 253952
      %40 = vst.msk [vmem:[%s38] sm:$0x1] %vm39, %v37
    $region14: #{tpu_custom_call.1} parent=1 // loop_footer
      %s24 = sadd.s32 1, %s20
    $region15: #{tpu_custom_call.1} parent=1 // loop_footer_branch
      %19 = sbr.rel target = $region11
    $region16: #{tpu_custom_call.1} parent=1 // loop_exit
      _
    loop: start=0, step=1, limit=8
    $region17: #{tpu_custom_call.1} parent=1 // loop_pre_header
      _
    $region18: #{tpu_custom_call.1} parent=1 // loop_header
      %s42 = sphi 0, %s46
      %p43 = scmp.ge.s32.totalorder %s42, 8
    $region19: #{tpu_custom_call.1} parent=1 // loop_header_branch
      %45 = sbr.rel (%p43) target = $region23
    $region20: #{tpu_custom_call.1} parent=1 // loop_body
      %s47 = smul.u32 0, 8
      %s48 = sadd.s32 %s47, %s42
      %s49 = sshra.s32 %s48, 7
      %s50 = sand.u32 %s48, 127
      %s51 = sadd.s32 %s49, 1
      %s52 = smul.u32 %s51, 128
      %s53 = sshra.s32 %s48, 7
      %s54 = sand.u32 %s48, 127
      %s55 = sadd.s32 %s52, %s54
      %s56 = sld [smem:[#allocation3 + %s55]]
      %p57 = scmp.gt.s32.totalorder %s56, 0
      %s58 = scalar_select %p57, %s56, 0
      %p59 = scmp.lt.s32.totalorder %s58, 49
      %s60 = scalar_select %p59, %s58, 49
      %s61 = scalar_lea.vmem %s1, %s60
      %v62 = vld [vmem:[%s61] sm:$0x1]
      %v63 = vmul.f32 %v62, 5.656854
      %s64 = scalar_lea.vmem %s2, %s42
      %v65 = vld [vmem:[%s64] sm:$0x1]
      %v66 = vadd.f32 %v63, %v65
      %s67 = sadd.s32 %s42, 8
      %s68 = scalar_lea.vmem [#allocation4], %s67
      %vm69 = vcmask 253952
      %70 = vst.msk [vmem:[%s68] sm:$0x1] %vm69, %v66
    $region21: #{tpu_custom_call.1} parent=1 // loop_footer
      %s46 = sadd.s32 1, %s42
    $region22: #{tpu_custom_call.1} parent=1 // loop_footer_branch
      %41 = sbr.rel target = $region18
    $region23: #{tpu_custom_call.1} parent=1 // loop_exit
      _
    // Predicated region
    $region24: #{tpu_custom_call.1} parent=1 // pred_check
      _
    $region25: #{tpu_custom_call.1} parent=1 // pred_check_branch
      %72 = sbr.rel (0) target = $region27
    $region26: #{tpu_custom_call.1} parent=1 // pred_region
      %s74 = ssub.s32 256, 256
      %75 = vsyncadd [#allocation5], %s74
      %s76 = sshll.u32 [#allocation4], 4
      %s77 = int_to_ptr.vmem [resolvable:$true] %s76
      %82 = dma.vmem_to_hbm [thread:$0]  %s77, 256, %s3, [#allocation5], 128, 128, 8
    $region27: #{tpu_custom_call.1} parent=1 // pred_fallthru
      _
    // Predicated region
    $region28: #{tpu_custom_call.1} parent=1 // pred_check
      _
    $region29: #{tpu_custom_call.1} parent=1 // pred_check_branch
      %84 = sbr.rel (0) target = $region31
    $region30: #{tpu_custom_call.1} parent=1 // pred_region
      %85 = dma.done [#allocation5], 256
    $region31: #{tpu_custom_call.1} parent=1 // pred_fallthru
      _
    %86 = vsyncpa [#allocation5], 1

</llo_original>
